<compile_context>
chip_gen: v6e
topology: v6e:2x2x1
jax: 0.10.0
libtpu: 0.0.40
codegen_flags: <defaults>
</compile_context>

<pallas_src>
import functools
import math

import numpy as np
import jax
import jax.numpy as jnp
from jax import lax
from jax.experimental import pallas as pl
from jax.experimental.pallas import tpu as pltpu


def _round_up(x, m):
    return ((x + m - 1) // m) * m


def _triplet_kernel(xa_ref, xp_ref, xn_ref, out_ref, *, margin, num_neg, tn):
    """Per grid cell (q, t):
       xa_ref/xp_ref : (1, 1, dim)   anchor / positive row of query q
       xn_ref        : (1, tn, dim)  tile t of the negatives of query q
       out_ref       : (1, tn, 1)    per-negative hinge values (0 for padding)
    """
    t = pl.program_id(1)

    xa = xa_ref[...].astype(jnp.float32)          # (1, 1, dim)
    xp = xp_ref[...].astype(jnp.float32)          # (1, 1, dim)
    xn = xn_ref[...].astype(jnp.float32)          # (1, tn, dim)

    # dist_pos depends only on the query -> compute once per tile (O(dim)).
    dpos = jnp.sum((xa - xp) ** 2, axis=-1)       # (1, 1)
    # dist_neg per negative row (reduce over lanes -> XLU slot).
    dneg = jnp.sum((xn - xa) ** 2, axis=-1)       # (1, tn)

    hinge = jnp.maximum(dpos - dneg + margin, 0.0)  # (1, tn)

    # Mask padded negative rows of the last tile (they would otherwise
    # contribute `margin` each).
    col = lax.broadcasted_iota(jnp.int32, (1, tn), 1) + t * tn
    hinge = jnp.where(col < num_neg, hinge, 0.0)

    out_ref[...] = hinge[:, :, None]              # (1, tn, 1)


def triplet_loss_pallas(x, label, margin=0.1):
    """x: (dim, N) array; label: host int array (N,) in {-1, 0, 1}.

    The boolean-mask column selection is data dependent (dynamic output
    shapes), so the index computation is host-side numpy and the gather /
    transpose is XLA glue; the distance/hinge hot path runs in Pallas.
    """
    label_np = np.asarray(label)
    dim, n = x.shape
    nq = int(np.sum(label_np == -1))              # number of queries (anchors)
    S = n // nq                                   # tuple size per query
    num_neg = S - 2                               # negatives per query

    if num_neg <= 0:
        return jnp.float32(0.0)

    idx_a = np.nonzero(label_np == -1)[0]
    idx_p = np.nonzero(label_np == 1)[0]
    idx_n = np.nonzero(label_np == 0)[0]

    # Transpose so dim is the (lane) minor axis; select rows.
    xt = jnp.transpose(x)                         # (N, dim)
    xa = xt[idx_a][:, None, :]                    # (nq, 1, dim)
    xp = xt[idx_p][:, None, :]                    # (nq, 1, dim)
    xn = xt[idx_n].reshape(nq, num_neg, dim)      # (nq, S-2, dim)

    # --- negative-tile sizing: keep each xn tile <= ~2 MiB (f32) so
    # 2-deep pipelining fits the smallest default scoped VMEM (v5e: 16 MiB).
    max_tile_bytes = 2 * 1024 * 1024
    tn_cap = max(8, (max_tile_bytes // (dim * 4)) // 8 * 8)
    TN = min(_round_up(num_neg, 8), tn_cap)
    num_tiles = math.ceil(num_neg / TN)
    neg_pad = num_tiles * TN
    if neg_pad != num_neg:
        xn = jnp.pad(xn, ((0, 0), (0, neg_pad - num_neg), (0, 0)))

    kernel = functools.partial(
        _triplet_kernel, margin=float(margin), num_neg=num_neg, tn=TN)

    hinge = pl.pallas_call(
        kernel,
        out_shape=jax.ShapeDtypeStruct((nq, neg_pad, 1), jnp.float32),
        grid_spec=pltpu.PrefetchScalarGridSpec(
            num_scalar_prefetch=0,
            grid=(nq, num_tiles),
            in_specs=[
                # anchor / positive row of query q, re-used for every neg tile
                pl.BlockSpec((1, 1, dim), lambda q, t: (q, 0, 0)),
                pl.BlockSpec((1, 1, dim), lambda q, t: (q, 0, 0)),
                # tile t of the negatives of query q
                pl.BlockSpec((1, TN, dim), lambda q, t: (q, t, 0)),
            ],
            out_specs=pl.BlockSpec((1, TN, 1), lambda q, t: (q, t, 0)),
        ),
        compiler_params=pltpu.CompilerParams(
            dimension_semantics=("parallel", "parallel")),
    )(xa, xp, xn)

    # Tiny final reduction over the per-negative hinge values.
    return jnp.sum(hinge)


def _reference_loss(x, label, margin=0.1):
    """Pure-JAX re-implementation of the torch reference, for a sanity check."""
    label_np = np.asarray(label)
    dim, n = x.shape
    nq = int(np.sum(label_np == -1))
    S = n // nq
    xa = jnp.repeat(x[:, np.nonzero(label_np == -1)[0]], S - 2, axis=1)
    xp = jnp.repeat(x[:, np.nonzero(label_np == 1)[0]], S - 2, axis=1)
    xn = x[:, np.nonzero(label_np == 0)[0]]
    dist_pos = jnp.sum((xa - xp) ** 2, axis=0)
    dist_neg = jnp.sum((xa - xn) ** 2, axis=0)
    return jnp.sum(jnp.maximum(dist_pos - dist_neg + margin, 0.0))


if __name__ == "__main__":
    key = jax.random.PRNGKey(0)
    dim = 32          # descriptor dimension
    nq = 2            # number of queries (anchors)
    S = 5             # tuple size: 1 anchor + 1 positive + (S-2)=3 negatives
    n = nq * S

    x = jax.random.normal(key, (dim, n), dtype=jnp.float32)
    # tuple layout per query: [-1 (anchor), 1 (positive), 0, 0, 0 (negatives)]
    label = np.tile(np.array([-1, 1, 0, 0, 0], dtype=np.int32), nq)

    loss = jax.block_until_ready(triplet_loss_pallas(x, label, margin=0.1))
    ref = jax.block_until_ready(_reference_loss(x, label, margin=0.1))
    assert np.allclose(np.asarray(loss), np.asarray(ref), rtol=1e-5, atol=1e-5), (loss, ref)

    print("KERNEL_OK")
</pallas_src>

<mosaic_0001>
module attributes {stable_mosaic.version = 11 : i64} {
  func.func @_triplet_kernel(%arg0: i32, %arg1: i32, %arg2: memref<1x1x32xf32, #tpu.memory_space<vmem>>, %arg3: memref<1x1x32xf32, #tpu.memory_space<vmem>>, %arg4: memref<1x8x32xf32, #tpu.memory_space<vmem>>, %arg5: memref<1x8x1xf32, #tpu.memory_space<vmem>>) attributes {dimension_semantics = [#tpu.dimension_semantics<parallel>, #tpu.dimension_semantics<parallel>], iteration_bounds = array<i64: 2, 1>, scalar_prefetch = 0 : i64, scratch_operands = 0 : i64, tpu.core_type = #tpu.core_type<tc>, window_params = [{transform_indices = @transform_0, window_bounds = array<i64: 1, 1, 32>}, {transform_indices = @transform_1, window_bounds = array<i64: 1, 1, 32>}, {transform_indices = @transform_2, window_bounds = array<i64: 1, 8, 32>}, {transform_indices = @transform_3, window_bounds = array<i64: 1, 8, 1>}]} {
    %c0 = arith.constant 0 : index
    %c0_0 = arith.constant 0 : index
    %c0_1 = arith.constant 0 : index
    %0 = vector.load %arg2[%c0, %c0_0, %c0_1] : memref<1x1x32xf32, #tpu.memory_space<vmem>>, vector<1x1x32xf32>
    %c0_2 = arith.constant 0 : index
    %c0_3 = arith.constant 0 : index
    %c0_4 = arith.constant 0 : index
    %1 = vector.load %arg3[%c0_2, %c0_3, %c0_4] : memref<1x1x32xf32, #tpu.memory_space<vmem>>, vector<1x1x32xf32>
    %c0_5 = arith.constant 0 : index
    %c0_6 = arith.constant 0 : index
    %c0_7 = arith.constant 0 : index
    %2 = vector.load %arg4[%c0_5, %c0_6, %c0_7] : memref<1x8x32xf32, #tpu.memory_space<vmem>>, vector<1x8x32xf32>
    %3 = arith.subf %0, %1 : vector<1x1x32xf32>
    %4 = arith.mulf %3, %3 : vector<1x1x32xf32>
    %cst = arith.constant dense<0.000000e+00> : vector<1x1xf32>
    %5 = vector.multi_reduction <add>, %4, %cst [2] : vector<1x1x32xf32> to vector<1x1xf32>
    %6 = vector.broadcast %0 : vector<1x1x32xf32> to vector<1x8x32xf32>
    %7 = arith.subf %2, %6 : vector<1x8x32xf32>
    %8 = arith.mulf %7, %7 : vector<1x8x32xf32>
    %cst_8 = arith.constant dense<0.000000e+00> : vector<1x8xf32>
    %9 = vector.multi_reduction <add>, %8, %cst_8 [2] : vector<1x8x32xf32> to vector<1x8xf32>
    %10 = vector.broadcast %5 : vector<1x1xf32> to vector<1x8xf32>
    %11 = arith.subf %10, %9 : vector<1x8xf32>
    %cst_9 = arith.constant 1.000000e-01 : f32
    %12 = vector.broadcast %cst_9 : f32 to vector<1x8xf32>
    %13 = arith.addf %11, %12 : vector<1x8xf32>
    %cst_10 = arith.constant 0.000000e+00 : f32
    %14 = vector.broadcast %cst_10 : f32 to vector<1x8xf32>
    %15 = arith.maximumf %13, %14 : vector<1x8xf32>
    %16 = tpu.iota {dimensions = array<i32: 1>} : vector<1x8xi32>
    %c8_i32 = arith.constant 8 : i32
    %17 = arith.muli %arg1, %c8_i32 : i32
    %18 = vector.broadcast %17 : i32 to vector<1x8xi32>
    %19 = arith.addi %16, %18 : vector<1x8xi32>
    %c3_i32 = arith.constant 3 : i32
    %20 = vector.broadcast %c3_i32 : i32 to vector<1x8xi32>
    %21 = arith.cmpi slt, %19, %20 : vector<1x8xi32>
    %cst_11 = arith.constant 0.000000e+00 : f32
    %22 = vector.broadcast %cst_11 : f32 to vector<1x8xf32>
    %23 = arith.select %21, %15, %22 : vector<1x8xi1>, vector<1x8xf32>
    %24 = vector.shape_cast %23 : vector<1x8xf32> to vector<1x8x1xf32>
    %c0_12 = arith.constant 0 : index
    %c0_13 = arith.constant 0 : index
    %c0_14 = arith.constant 0 : index
    %25 = vector.load %arg5[%c0_12, %c0_13, %c0_14] : memref<1x8x1xf32, #tpu.memory_space<vmem>>, vector<1x8x1xf32>
    tpu.vector_store %arg5[%c0_12, %c0_13, %c0_14], %24 {strides = array<i32>} : memref<1x8x1xf32, #tpu.memory_space<vmem>>, vector<1x8x1xf32>,
    return
  }
  func.func @transform_0(%arg0: i32, %arg1: i32) -> (i32, i32, i32) {
    %c0_i32 = arith.constant 0 : i32
    %c0_i32_0 = arith.constant 0 : i32
    %c0_i32_1 = arith.constant 0 : i32
    return %arg0, %c0_i32, %c0_i32_0 : i32, i32, i32
  }
  func.func @transform_1(%arg0: i32, %arg1: i32) -> (i32, i32, i32) {
    %c0_i32 = arith.constant 0 : i32
    %c0_i32_0 = arith.constant 0 : i32
    %c0_i32_1 = arith.constant 0 : i32
    return %arg0, %c0_i32, %c0_i32_0 : i32, i32, i32
  }
  func.func @transform_2(%arg0: i32, %arg1: i32) -> (i32, i32, i32) {
    %c0_i32 = arith.constant 0 : i32
    %c0_i32_0 = arith.constant 0 : i32
    return %arg0, %arg1, %c0_i32 : i32, i32, i32
  }
  func.func @transform_3(%arg0: i32, %arg1: i32) -> (i32, i32, i32) {
    %c0_i32 = arith.constant 0 : i32
    %c0_i32_0 = arith.constant 0 : i32
    return %arg0, %arg1, %c0_i32 : i32, i32, i32
  }
}

</mosaic_0001>

<llo_original>
// kernel: tpu_custom_call.1
$region0: #{tpu_custom_call.1}
  #allocation0 [shape = 'u32[]', space=smem, size = 0x4, offset = 0x4, fixed_abs, tag = 'smem constant byte address 0x4 - core index']
  #allocation1 [shape = 'u32[144,128]{1,0:T(1,128)}', space=vmem, size = 0x12000, scoped, tag = 'internal scratch']
  %s0 = inlined_call_operand.hbm [shape: f32[2,1,32], index: 0, kind: input, shape index: {}]
  %s1 = inlined_call_operand.hbm [shape: f32[2,1,32], index: 1, kind: input, shape index: {}]
  %s2 = inlined_call_operand.hbm [shape: f32[2,8,32], index: 2, kind: input, shape index: {}]
  %s3 = inlined_call_operand.vmem [shape: f32[2,8,1], index: 3, kind: output, shape index: {}]
  %s4 = sld [smem:[#allocation0]]
  $region57: #{tpu_custom_call.1} parent=0
    _
  %s6 = ssub.s32 1, %s4
  %s7 = scalar_select 0, %s6, %s4
  $region1: #{tpu_custom_call.1} parent=0
    #allocation2 [shape = 'u8[1024]{0}', space=vmem, size = 0x400, scoped, tag = 'input window, operand 0']
    #allocation3 [shape = 's32[2]{0}', space=sflag, size = 0x8, scoped, tag = 'scoped memory for tpu_custom_call.1']
    #allocation4 [shape = 'u8[1024]{0}', space=vmem, size = 0x400, scoped, tag = 'input window, operand 1']
    #allocation5 [shape = 's32[2]{0}', space=sflag, size = 0x8, scoped, tag = 'scoped memory for tpu_custom_call.1']
    #allocation6 [shape = 'u8[8192]{0}', space=vmem, size = 0x2000, scoped, tag = 'input window, operand 2']
    %8 = vsyncpa [#allocation3], 0
    %s9 = scalar_lea.sflag [#allocation3], 1
    %10 = vsyncpa %s9, 0
    %11 = vsyncpa [#allocation5], 0
    %s12 = scalar_lea.sflag [#allocation5], 1
    %13 = vsyncpa %s12, 0
    loop: start=0, step=1, limit=4
    $region2: #{tpu_custom_call.1} parent=1 // loop_pre_header
      _
    $region3: #{tpu_custom_call.1} parent=1 // loop_header
      %s15 = sphi 0, %s19
      %p16 = scmp.ge.s32.totalorder %s15, 4
      %s22 = sphi 0, %s34
      %s23 = sphi 0, %s30
      %s24 = sphi 0, %s22
      %s25 = sphi 0, %s23
      %s26 = sphi 0, %s24
      %s27 = sphi 0, %s25
      %s37 = sphi 0, %s39
      %s40 = sphi 0, %s37
      %s41 = sphi 0, %s40
      %s57 = sphi 0, %s41
      %s63 = sphi 0, %s65
      %s66 = sphi 0, %s63
      %s67 = sphi 0, %s66
      %s83 = sphi 0, %s67
      %s91 = sphi 0, %s93
      %s94 = sphi 0, %s91
      %s95 = sphi 0, %s94
      %s111 = sphi 0, %s95
      %s119 = sphi 0, %s121
      %s122 = sphi 0, %s119
      %s123 = sphi 0, %s122
      %s139 = sphi 0, %s123
    $region4: #{tpu_custom_call.1} parent=1 // loop_header_branch
      %18 = sbr.rel (%p16) target = $region8
    $region5: #{tpu_custom_call.1} parent=1 // loop_body
      %s20 = ssub.s32 %s15, 1
      %s21 = ssub.s32 %s15, 2
      %s28 = sadd.s32 1, %s23
      %p29 = scmp.ge.s32.totalorder %s28, 1
      %s30 = scalar_select %p29, 0, %s28
      %s31 = sadd.s32 1, %s22
      %s32 = scalar_select %p29, %s31, %s22
      %p33 = scmp.ge.s32.totalorder %s32, 2
      %s34 = scalar_select %p33, 0, %s32
      %s35 = ssub.s32 %s22, %s34
      %p36 = scmp.eq.s32.totalorder %s35, 0
      %s38 = sadd.s32 %s37, 1
      %s39 = scalar_select %p36, %s37, %s38
      %p42 = pneg %p36
      %p43 = scmp.eq.s32.totalorder %s15, 1
      %p44 = por %p42, %p43
      %p45 = scmp.ne.s32.totalorder %s37, %s40
      %p46 = scmp.eq.s32.totalorder %s15, 0
      %p47 = por %p45, %p46
      %p48 = scmp.ne.s32.totalorder %s37, %s40
      %p49 = scmp.eq.s32.totalorder %s20, 1
      %p50 = por %p48, %p49
      %p51 = scmp.ne.s32.totalorder %s40, %s41
      %p52 = scmp.eq.s32.totalorder %s20, 0
      %p53 = por %p51, %p52
      %p54 = scmp.ne.s32.totalorder %s40, %s41
      %p55 = scmp.eq.s32.totalorder %s21, 1
      %p56 = por %p54, %p55
      %p58 = scmp.ne.s32.totalorder %s41, %s57
      %p59 = scmp.eq.s32.totalorder %s21, 0
      %p60 = por %p58, %p59
      %s61 = ssub.s32 %s22, %s34
      %p62 = scmp.eq.s32.totalorder %s61, 0
      %s64 = sadd.s32 %s63, 1
      %s65 = scalar_select %p62, %s63, %s64
      %p68 = pneg %p62
      %p69 = scmp.eq.s32.totalorder %s15, 1
      %p70 = por %p68, %p69
      %p71 = scmp.ne.s32.totalorder %s63, %s66
      %p72 = scmp.eq.s32.totalorder %s15, 0
      %p73 = por %p71, %p72
      %p74 = scmp.ne.s32.totalorder %s63, %s66
      %p75 = scmp.eq.s32.totalorder %s20, 1
      %p76 = por %p74, %p75
      %p77 = scmp.ne.s32.totalorder %s66, %s67
      %p78 = scmp.eq.s32.totalorder %s20, 0
      %p79 = por %p77, %p78
      %p80 = scmp.ne.s32.totalorder %s66, %s67
      %p81 = scmp.eq.s32.totalorder %s21, 1
      %p82 = por %p80, %p81
      %p84 = scmp.ne.s32.totalorder %s67, %s83
      %p85 = scmp.eq.s32.totalorder %s21, 0
      %p86 = por %p84, %p85
      %s87 = ssub.s32 %s22, %s34
      %s88 = ssub.s32 %s23, %s30
      %s89 = sor.u32 %s87, %s88
      %p90 = scmp.eq.s32.totalorder %s89, 0
      %s92 = sadd.s32 %s91, 1
      %s93 = scalar_select %p90, %s91, %s92
      %p96 = pneg %p90
      %p97 = scmp.eq.s32.totalorder %s15, 1
      %p98 = por %p96, %p97
      %p99 = scmp.ne.s32.totalorder %s91, %s94
      %p100 = scmp.eq.s32.totalorder %s15, 0
      %p101 = por %p99, %p100
      %p102 = scmp.ne.s32.totalorder %s91, %s94
      %p103 = scmp.eq.s32.totalorder %s20, 1
      %p104 = por %p102, %p103
      %p105 = scmp.ne.s32.totalorder %s94, %s95
      %p106 = scmp.eq.s32.totalorder %s20, 0
      %p107 = por %p105, %p106
      %p108 = scmp.ne.s32.totalorder %s94, %s95
      %p109 = scmp.eq.s32.totalorder %s21, 1
      %p110 = por %p108, %p109
      %p112 = scmp.ne.s32.totalorder %s95, %s111
      %p113 = scmp.eq.s32.totalorder %s21, 0
      %p114 = por %p112, %p113
      %s115 = ssub.s32 %s22, %s34
      %s116 = ssub.s32 %s23, %s30
      %s117 = sor.u32 %s115, %s116
      %p118 = scmp.eq.s32.totalorder %s117, 0
      %s120 = sadd.s32 %s119, 1
      %s121 = scalar_select %p118, %s119, %s120
      %p124 = pneg %p118
      %p125 = scmp.eq.s32.totalorder %s15, 1
      %p126 = por %p124, %p125
      %p127 = scmp.ne.s32.totalorder %s119, %s122
      %p128 = scmp.eq.s32.totalorder %s15, 0
      %p129 = por %p127, %p128
      %p130 = scmp.ne.s32.totalorder %s119, %s122
      %p131 = scmp.eq.s32.totalorder %s20, 1
      %p132 = por %p130, %p131
      %p133 = scmp.ne.s32.totalorder %s122, %s123
      %p134 = scmp.eq.s32.totalorder %s20, 0
      %p135 = por %p133, %p134
      %p136 = scmp.ne.s32.totalorder %s122, %s123
      %p137 = scmp.eq.s32.totalorder %s21, 1
      %p138 = por %p136, %p137
      %p140 = scmp.ne.s32.totalorder %s123, %s139
      %p141 = scmp.eq.s32.totalorder %s21, 0
      %p142 = por %p140, %p141
      %p143 = scmp.le.s32.totalorder 1, %s15
      %p144 = scmp.lt.s32.totalorder %s15, 3
      %p145 = pnand %p143, %p144
      %p146 = pneg %p145
      // Predicated region
      $region9: #{tpu_custom_call.1} parent=5 // pred_check
        _
      $region10: #{tpu_custom_call.1} parent=5 // pred_check_branch
        %148 = sbr.rel (%p145) target = $region12
      $region11: #{tpu_custom_call.1} parent=5 // pred_region
        %s149 = ssub.s32 %s15, 1
      $region12: #{tpu_custom_call.1} parent=5 // pred_fallthru
        _
      %p150 = scmp.lt.s32.totalorder %s15, 2
      // Predicated region
      $region13: #{tpu_custom_call.1} parent=5 // pred_check
        %p151 = pneg %p150
      $region14: #{tpu_custom_call.1} parent=5 // pred_check_branch
        %153 = sbr.rel (%p151) target = $region16
      $region15: #{tpu_custom_call.1} parent=5 // pred_region
        // Predicated region
        $region17: #{tpu_custom_call.1} parent=15 // pred_check
          %p154 = pneg %p47
        $region18: #{tpu_custom_call.1} parent=15 // pred_check_branch
          %156 = sbr.rel (%p154) target = $region20
        $region19: #{tpu_custom_call.1} parent=15 // pred_region
          %s157 = sand.u32 %s37, 1
          %s158 = scalar_lea.sflag [#allocation3], %s157
          %s159 = sand.u32 %s37, 1
          %s160 = scalar_lea.vmem [#allocation2], %s159
          %s162 = ssub.s32 16, 16
          %163 = vsyncadd %s158, %s162
          %s164 = smul.addr %s22, 16
          %s165 = scalar_lea.hbm %s0, %s164
          %s167 = sshll.u32 %s160, 4
          %s168 = int_to_ptr.vmem [resolvable:$true] %s167
          %170 = dma.hbm_to_vmem [thread:$0]  %s165, 16, %s168, %s158
        $region20: #{tpu_custom_call.1} parent=15 // pred_fallthru
          _
        // Predicated region
        $region21: #{tpu_custom_call.1} parent=15 // pred_check
          %p171 = pneg %p73
        $region22: #{tpu_custom_call.1} parent=15 // pred_check_branch
          %173 = sbr.rel (%p171) target = $region24
        $region23: #{tpu_custom_call.1} parent=15 // pred_region
          %s174 = sand.u32 %s15, 1
          %s175 = scalar_lea.sflag [#allocation5], %s174
          %s176 = sand.u32 %s63, 1
          %s177 = scalar_lea.vmem [#allocation4], %s176
          %s179 = ssub.s32 16, 16
          %180 = vsyncadd %s175, %s179
          %s181 = smul.addr %s22, 16
          %s182 = scalar_lea.hbm %s1, %s181
          %s184 = sshll.u32 %s177, 4
          %s185 = int_to_ptr.vmem [resolvable:$true] %s184
          %187 = dma.hbm_to_vmem [thread:$0]  %s182, 16, %s185, %s175
        $region24: #{tpu_custom_call.1} parent=15 // pred_fallthru
          _
        // Predicated region
        $region25: #{tpu_custom_call.1} parent=15 // pred_check
          %p188 = pneg %p101
        $region26: #{tpu_custom_call.1} parent=15 // pred_check_branch
          %190 = sbr.rel (%p188) target = $region28
        $region27: #{tpu_custom_call.1} parent=15 // pred_region
          %s191 = sand.u32 %s15, 1
          %s192 = scalar_lea.sflag [#allocation5], %s191
          %s193 = sand.u32 %s91, 1
          %s194 = smul.addr %s193, 8
          %s195 = scalar_lea.vmem [#allocation6], %s194
          %s197 = ssub.s32 128, 128
          %198 = vsyncadd %s192, %s197
          %s199 = sadd.s32 %s23, %s22
          %s200 = smul.addr %s199, 128
          %s201 = scalar_lea.hbm %s2, %s200
          %s203 = sshll.u32 %s195, 4
          %s204 = int_to_ptr.vmem [resolvable:$true] %s203
          %206 = dma.hbm_to_vmem [thread:$0]  %s201, 128, %s204, %s192
        $region28: #{tpu_custom_call.1} parent=15 // pred_fallthru
          _
      $region16: #{tpu_custom_call.1} parent=5 // pred_fallthru
        _
      %p207 = scmp.le.s32.totalorder 1, %s15
      %p208 = scmp.lt.s32.totalorder %s15, 3
      %p209 = pnand %p207, %p208
      %p210 = pneg %p209
      // Predicated region
      $region29: #{tpu_custom_call.1} parent=5 // pred_check
        _
      $region30: #{tpu_custom_call.1} parent=5 // pred_check_branch
        %212 = sbr.rel (%p209) target = $region32
      $region31: #{tpu_custom_call.1} parent=5 // pred_region
        %s213 = ssub.s32 %s15, 1
        %s214 = sand.u32 %s40, 1
        %s215 = scalar_lea.sflag [#allocation3], %s214
        %s216 = sand.u32 %s40, 1
        %s217 = scalar_lea.vmem [#allocation2], %s216
        // Predicated region
        $region33: #{tpu_custom_call.1} parent=31 // pred_check
          %p218 = pneg %p53
        $region34: #{tpu_custom_call.1} parent=31 // pred_check_branch
          %220 = sbr.rel (%p218) target = $region36
        $region35: #{tpu_custom_call.1} parent=31 // pred_region
          %221 = dma.done %s215, 16
        $region36: #{tpu_custom_call.1} parent=31 // pred_fallthru
          _
        %s222 = sand.u32 %s20, 1
        %s223 = scalar_lea.sflag [#allocation5], %s222
        %s224 = sand.u32 %s66, 1
        %s225 = scalar_lea.vmem [#allocation4], %s224
        // Predicated region
        $region37: #{tpu_custom_call.1} parent=31 // pred_check
          %p226 = pneg %p79
        $region38: #{tpu_custom_call.1} parent=31 // pred_check_branch
          %228 = sbr.rel (%p226) target = $region40
        $region39: #{tpu_custom_call.1} parent=31 // pred_region
          %229 = dma.done %s223, 16
        $region40: #{tpu_custom_call.1} parent=31 // pred_fallthru
          _
        %s230 = sand.u32 %s20, 1
        %s231 = scalar_lea.sflag [#allocation5], %s230
        %s232 = sand.u32 %s94, 1
        %s233 = smul.addr %s232, 8
        %s234 = scalar_lea.vmem [#allocation6], %s233
        // Predicated region
        $region41: #{tpu_custom_call.1} parent=31 // pred_check
          %p235 = pneg %p107
        $region42: #{tpu_custom_call.1} parent=31 // pred_check_branch
          %237 = sbr.rel (%p235) target = $region44
        $region43: #{tpu_custom_call.1} parent=31 // pred_region
          %238 = dma.done %s231, 128
        $region44: #{tpu_custom_call.1} parent=31 // pred_fallthru
          _
        %s239 = sand.u32 %s40, 1
        %s240 = scalar_lea.sflag [#allocation3], %s239
        %s241 = sand.u32 %s40, 1
        %s242 = scalar_lea.vmem [#allocation2], %s241
        %p243 = pneg %p53
        %p244 = pneg %p50
        %s245 = sand.u32 %s20, 1
        %s246 = scalar_lea.sflag [#allocation5], %s245
        %s247 = sand.u32 %s66, 1
        %s248 = scalar_lea.vmem [#allocation4], %s247
        %p249 = pneg %p79
        %p250 = pneg %p76
        %s251 = sand.u32 %s20, 1
        %s252 = scalar_lea.sflag [#allocation5], %s251
        %s253 = sand.u32 %s94, 1
        %s254 = smul.addr %s253, 8
        %s255 = scalar_lea.vmem [#allocation6], %s254
        %p256 = pneg %p107
        %p257 = pneg %p104
        %p258 = pneg %p135
        %p259 = pneg %p132
        %p260 = scmp.lt.s32.totalorder %s24, 1
        %s261 = scalar_select %p260, %s24, 1
        %p262 = scmp.lt.s32.totalorder %s25, 0
        %s263 = scalar_select %p262, %s25, 0
        %s264 = sadd.s32 %s263, %s261
        %s265 = smul.addr %s264, 8
        %s266 = scalar_lea.vmem %s3, %s265
        %p267 = scmp.lt.s32.totalorder %s24, 1
        %s268 = scalar_select %p267, %s24, 1
        %p269 = scmp.lt.s32.totalorder %s25, 0
        %s270 = scalar_select %p269, %s25, 0
        %s271 = sadd.s32 %s270, %s268
        %s272 = smul.addr %s271, 8
        %s273 = scalar_lea.vmem %s3, %s272
        %v274 = vld [vmem:[%s217] sm:$0x1]
        %v275 = vld [vmem:[%s225] sm:$0x1]
        %v276 = vld [vmem:[%s234] sm:$0xff]
        %v277 = vsub.f32 %v274, %v275
        %v278 = vmul.f32 %v277, %v277
        %vm279 = vcmask 253952
        %v280 = vsel %vm279, %v278, 0.0
        %281 = vadd.xlane.f32.xlu0 %v280
        %v282 = vpop.xlane.xlu0 %281
        %v284 = vlaneseq
        %v285 = vshrl.u32 %v284, 7
        %v286 = vsub.s32 0, %v285
        %v287 = vrot.slane %v274, %v286
        %v289 = vsub.f32 %v276, %v287
        %v290 = vmul.f32 %v289, %v289
        %vm291 = vcmask 261120
        %v292 = vsel %vm291, %v290, 0.0
        %293 = vadd.xlane.f32.xlu0 %v292
        %v294 = vpop.xlane.xlu0 %293
        %v296 = vlaneseq
        %v297 = vand.u32 %v296, 127
        %v298 = vlaneseq
        %v299 = vshrl.u32 %v298, 7
        %v300 = vsub.s32 %v297, %v299
        %v301 = vrot.slane %v294, %v300
        %v303 = vsub.f32 %v282, %v301
        %v304 = vadd.f32 %v303, 0.1
        %v305 = vmax.f32 %v304, 0.0
        %s306 = smul.u32 %s25, 8
        %v307 = vstv %s306
        %v308 = vadd.s32 %v297, %v307
        %vm309 = vcmp.lt.s32.totalorder %v308, 3
        %v310 = vsel %vm309, %v305, 0.0
        %v311 = vlaneseq
        %v312 = vshrl.u32 %v311, 7
        %v313 = vsub.s32 0, %v312
        %v314 = vrot.slane %v310, %v313
        %316 = vbcast.lane.b32.xlu0 %v314, 256
        %v317 = vpop.permute.xlu0 %316
        %vm318 = vcmask 7168
        %319 = vst.msk [vmem:[%s273] sm:$0xff] %vm318, %v317
        %p320 = scmp.lt.s32.totalorder %s24, 1
        %s321 = scalar_select %p320, %s24, 1
        %p322 = scmp.lt.s32.totalorder %s25, 0
        %s323 = scalar_select %p322, %s25, 0
        %s324 = sadd.s32 %s323, %s321
        %s325 = smul.addr %s324, 8
        %s326 = scalar_lea.vmem %s3, %s325
        // Predicated region
        $region45: #{tpu_custom_call.1} parent=31 // pred_check
          %p327 = pneg %p132
        $region46: #{tpu_custom_call.1} parent=31 // pred_check_branch
          %329 = sbr.rel (%p327) target = $region48
        $region47: #{tpu_custom_call.1} parent=31 // pred_region
          _
        $region48: #{tpu_custom_call.1} parent=31 // pred_fallthru
          _
      $region32: #{tpu_custom_call.1} parent=5 // pred_fallthru
        _
      %p330 = scmp.le.s32.totalorder 2, %s15
      // Predicated region
      $region49: #{tpu_custom_call.1} parent=5 // pred_check
        %p331 = pneg %p330
      $region50: #{tpu_custom_call.1} parent=5 // pred_check_branch
        %333 = sbr.rel (%p331) target = $region52
      $region51: #{tpu_custom_call.1} parent=5 // pred_region
        %s334 = ssub.s32 %s15, 2
        // Predicated region
        $region53: #{tpu_custom_call.1} parent=51 // pred_check
          %p335 = pneg %p138
        $region54: #{tpu_custom_call.1} parent=51 // pred_check_branch
          %337 = sbr.rel (%p335) target = $region56
        $region55: #{tpu_custom_call.1} parent=51 // pred_region
          %p338 = scmp.lt.s32.totalorder %s26, 1
          %s339 = scalar_select %p338, %s26, 1
          %p340 = scmp.lt.s32.totalorder %s27, 0
          %s341 = scalar_select %p340, %s27, 0
          %s342 = sadd.s32 %s341, %s339
          %s343 = smul.addr %s342, 8
          %s344 = scalar_lea.vmem %s3, %s343
        $region56: #{tpu_custom_call.1} parent=51 // pred_fallthru
          _
      $region52: #{tpu_custom_call.1} parent=5 // pred_fallthru
        _
    $region6: #{tpu_custom_call.1} parent=1 // loop_footer
      %s19 = sadd.s32 1, %s15
    $region7: #{tpu_custom_call.1} parent=1 // loop_footer_branch
      %14 = sbr.rel target = $region3
    $region8: #{tpu_custom_call.1} parent=1 // loop_exit
      _
    %345 = vsyncpa [#allocation3], 1
    %s346 = scalar_lea.sflag [#allocation3], 1
    %347 = vsyncpa %s346, 1
    %348 = vsyncpa [#allocation5], 1
    %s349 = scalar_lea.sflag [#allocation5], 1
    %350 = vsyncpa %s349, 1

</llo_original>
